<compile_context>
chip_gen: v7x
topology: tpu7x:2x2x1
jax: 0.10.0
libtpu: 0.0.40
codegen_flags: <defaults>
</compile_context>

<pallas_src>
import functools

import jax
import jax.numpy as jnp
from jax.experimental import pallas as pl
from jax.experimental.pallas import tpu as pltpu


# ----------------------------------------------------------------------------
# helpers
# ----------------------------------------------------------------------------
def _round_up(x, m):
    return ((x + m - 1) // m) * m


def _num_tensorcores_per_chip():
    """Heuristic: 2 TCs/chip on v7x and megacore parts (v4/v5p), else 1."""
    try:
        kind = jax.devices()[0].device_kind.lower()
    except Exception:
        return 1
    if "v7" in kind or "7x" in kind:
        return 2
    if "v4" in kind or "v5p" in kind:
        return 2
    return 1


def _apply_activation(h, activation):
    if activation == "relu":
        return jnp.maximum(h, 0.0)
    elif activation == "sigmoid":
        return jax.nn.sigmoid(h)
    elif activation == "tanh":
        return jnp.tanh(h)
    elif activation == "sin":
        return jnp.sin(h)
    elif activation == "linear":
        return h
    else:
        raise ValueError(f"Unknown activation function: {activation}")


# ----------------------------------------------------------------------------
# kernel
# ----------------------------------------------------------------------------
def dense_layers_kernel(x_ref, *refs, num_layers, activation):
    """refs = (w0, b0, w1, b1, ..., w_{L-1}, b_{L-1}, out_ref)."""
    out_ref = refs[-1]
    h = x_ref[...].astype(jnp.float32)
    for i in range(num_layers):
        w = refs[2 * i][...]
        b = refs[2 * i + 1][...]
        # Feed the MXU in the parameter dtype (bf16 or f32); accumulate in f32.
        lhs = h if w.dtype == jnp.float32 else h.astype(w.dtype)
        h = jnp.dot(lhs, w, preferred_element_type=jnp.float32)
        h = h + b.astype(jnp.float32)
        if i < num_layers - 1:
            h = _apply_activation(h, activation)
    out_ref[...] = h.astype(out_ref.dtype)


# ----------------------------------------------------------------------------
# wrapper
# ----------------------------------------------------------------------------
_VMEM_BUDGET = 48 << 20  # conservative working budget (also fits v7x 64 MiB)


def _vmem_estimate_bytes(tile_b, in_dim, layer_out_dims, x_itemsize, param_bytes):
    out_pad = layer_out_dims[-1]
    # double-buffered input + output activations
    act = 2 * tile_b * in_dim * x_itemsize + 2 * tile_b * out_pad * x_itemsize
    # f32 intermediates held in vregs / VMEM temps (generous 4x largest layer)
    interm = 4 * tile_b * max([in_dim] + list(layer_out_dims)) * 4
    # params are (at worst) double-buffered by the pipeline
    return act + 2 * param_bytes + interm


def _choose_tile_b(batch, max_tile_b, num_tc):
    padded = _round_up(batch, 8)
    tile = min(_round_up(max_tile_b, 8), padded)
    # Keep >= num_tc grid steps on 2-TC chips so "parallel" shards the batch.
    if num_tc > 1 and padded // tile < num_tc and padded >= num_tc * 8:
        tile = _round_up(pl.cdiv(padded, num_tc), 8)
    return tile


def dense_layers_forward(x, weights, biases, activation="relu",
                         param_dtype=None, max_tile_b=512):
    """Forward pass of DenseLayers (batch_norm=False) as one Pallas kernel.

    weights[i]: (in_dim_i, out_dim_i)  (already transposed vs nn.Linear.weight)
    biases[i]:  (1, out_dim_i)
    """
    batch, in_dim = x.shape
    num_layers = len(weights)
    out_dim = weights[-1].shape[1]

    if param_dtype is not None:
        weights = [w.astype(param_dtype) for w in weights]
        biases = [b.astype(param_dtype) for b in biases]

    # ---- lane-dense output: pad last layer's columns to a multiple of 128 ----
    out_pad = _round_up(out_dim, 128)
    if out_pad != out_dim:
        weights = weights[:-1] + [
            jnp.pad(weights[-1], ((0, 0), (0, out_pad - out_dim)))]
        biases = biases[:-1] + [
            jnp.pad(biases[-1], ((0, 0), (0, out_pad - out_dim)))]

    layer_out_dims = [w.shape[1] for w in weights]
    param_bytes = sum(int(w.size) * jnp.dtype(w.dtype).itemsize
                      + int(b.size) * jnp.dtype(b.dtype).itemsize
                      for w, b in zip(weights, biases))
    x_itemsize = jnp.dtype(x.dtype).itemsize

    # ---- batch tile selection (big tile, megacore-aware, VMEM-bounded) ----
    num_tc = _num_tensorcores_per_chip()
    tile_b = _choose_tile_b(batch, max_tile_b, num_tc)
    while tile_b > 8 and _vmem_estimate_bytes(
            tile_b, in_dim, layer_out_dims, x_itemsize, param_bytes) > _VMEM_BUDGET:
        tile_b = max(8, _round_up(tile_b // 2, 8))

    batch_pad = _round_up(batch, tile_b)
    if batch_pad != batch:
        x = jnp.pad(x, ((0, batch_pad - batch), (0, 0)))
    grid = (batch_pad // tile_b,)

    vmem_est = _vmem_estimate_bytes(
        tile_b, in_dim, layer_out_dims, x_itemsize, param_bytes)
    vmem_limit = int(min(max(2 * vmem_est, 8 << 20), 64 << 20))

    # ---- specs ----
    in_specs = [pl.BlockSpec((tile_b, in_dim), lambda i: (i, 0))]
    args = [x]
    for w, b in zip(weights, biases):
        # Full-extent blocks; index map constant -> not re-fetched per tile.
        in_specs.append(pl.BlockSpec(w.shape, lambda i: (0, 0)))
        in_specs.append(pl.BlockSpec(b.shape, lambda i: (0, 0)))
        args.append(w)
        args.append(b)
    out_spec = pl.BlockSpec((tile_b, out_pad), lambda i: (i, 0))

    # ---- cost estimate for XLA scheduling around the kernel ----
    dims_full = [in_dim] + layer_out_dims
    flops = 2 * batch_pad * sum(a * b for a, b in zip(dims_full[:-1], dims_full[1:]))
    trans = (batch_pad * sum(dims_full[1:-1])
             if activation in ("sigmoid", "tanh", "sin") else 0)
    bytes_accessed = (int(x.size) * x_itemsize + param_bytes
                      + batch_pad * out_pad * x_itemsize)
    cost = pl.CostEstimate(flops=flops, transcendentals=trans,
                           bytes_accessed=bytes_accessed)

    kernel = functools.partial(
        dense_layers_kernel, num_layers=num_layers, activation=activation)

    out_padded = pl.pallas_call(
        kernel,
        out_shape=jax.ShapeDtypeStruct((batch_pad, out_pad), x.dtype),
        grid_spec=pltpu.PrefetchScalarGridSpec(
            num_scalar_prefetch=0,
            grid=grid,
            in_specs=in_specs,
            out_specs=out_spec,
        ),
        compiler_params=pltpu.CompilerParams(
            dimension_semantics=("parallel",),
            vmem_limit_bytes=vmem_limit,
        ),
        cost_estimate=cost,
    )(*args)

    if batch_pad == batch and out_pad == out_dim:
        return out_padded
    return out_padded[:batch, :out_dim]


# ----------------------------------------------------------------------------
# init + pure-JAX reference
# ----------------------------------------------------------------------------
def init_dense_layers_params(key, in_dim, out_dim, hidden_dims, scale=1.0):
    """Matches DenseLayers.__init__ (reset_parameters_gp weights, default bias).
    Weights returned already transposed to (in_features, out_features)."""
    dims = [in_dim] + list(hidden_dims) + [out_dim]
    weights, biases = [], []
    for i in range(len(dims) - 1):
        fan_in, fan_out = dims[i], dims[i + 1]
        key, kw, kb = jax.random.split(key, 3)
        w_std = scale / (fan_in ** 0.5)
        w = w_std * jax.random.normal(kw, (fan_in, fan_out), dtype=jnp.float32)
        b_bound = 1.0 / (fan_in ** 0.5)
        b = jax.random.uniform(kb, (1, fan_out), minval=-b_bound,
                               maxval=b_bound, dtype=jnp.float32)
        weights.append(w)
        biases.append(b)
    return weights, biases


def dense_layers_ref(x, weights, biases, activation="relu"):
    h = x
    n = len(weights)
    for i, (w, b) in enumerate(zip(weights, biases)):
        h = h @ w + b
        if i < n - 1:
            h = _apply_activation(h, activation)
    return h


# ----------------------------------------------------------------------------
# test
# ----------------------------------------------------------------------------
if __name__ == "__main__":
    # DenseLayers(in_dim=16, out_dim=8, hidden_dims=[32, 32],
    #             activation='relu', batch_norm=False, bias=True)
    in_dim, out_dim, hidden_dims = 16, 8, [32, 32]
    activation = "relu"

    key = jax.random.PRNGKey(0)
    key, kx1, kx2 = jax.random.split(key, 3)
    weights, biases = init_dense_layers_params(key, in_dim, out_dim, hidden_dims)

    # 1) f32 params, ragged batch (exercises padding path) -> tight tolerance.
    x1 = jax.random.normal(kx1, (20, in_dim), dtype=jnp.float32)
    out1 = dense_layers_forward(x1, weights, biases, activation=activation,
                                param_dtype=None)
    out1 = jax.block_until_ready(out1)
    ref1 = dense_layers_ref(x1, weights, biases, activation=activation)
    assert out1.shape == (20, out_dim)
    assert jnp.allclose(out1, ref1, atol=1e-5, rtol=1e-5), "f32 mismatch vs ref"

    # 2) bf16 params (halved DMA bytes, native MXU dtype) -> looser tolerance.
    x2 = jax.random.normal(kx2, (64, in_dim), dtype=jnp.float32)
    out2 = dense_layers_forward(x2, weights, biases, activation=activation,
                                param_dtype=jnp.bfloat16)
    out2 = jax.block_until_ready(out2)
    ref2 = dense_layers_ref(x2, weights, biases, activation=activation)
    assert out2.shape == (64, out_dim)
    assert jnp.allclose(out2, ref2, atol=5e-2, rtol=5e-2), "bf16 mismatch vs ref"

    # 3) tanh activation path (EUP transcendental), f32 params.
    out3 = dense_layers_forward(x2, weights, biases, activation="tanh")
    out3 = jax.block_until_ready(out3)
    ref3 = dense_layers_ref(x2, weights, biases, activation="tanh")
    assert jnp.allclose(out3, ref3, atol=1e-5, rtol=1e-5), "tanh mismatch vs ref"

    print("KERNEL_OK")
</pallas_src>

<mosaic_0001>
module attributes {stable_mosaic.version = 11 : i64} {
  func.func @dense_layers_kernel(%arg0: i32, %arg1: memref<24x16xf32, #tpu.memory_space<vmem>>, %arg2: memref<16x32xf32, #tpu.memory_space<vmem>>, %arg3: memref<1x32xf32, #tpu.memory_space<vmem>>, %arg4: memref<32x32xf32, #tpu.memory_space<vmem>>, %arg5: memref<1x32xf32, #tpu.memory_space<vmem>>, %arg6: memref<32x128xf32, #tpu.memory_space<vmem>>, %arg7: memref<1x128xf32, #tpu.memory_space<vmem>>, %arg8: memref<24x128xf32, #tpu.memory_space<vmem>>) attributes {dimension_semantics = [#tpu.dimension_semantics<parallel>], iteration_bounds = array<i64: 1>, scalar_prefetch = 0 : i64, scratch_operands = 0 : i64, tpu.core_type = #tpu.core_type<tc>, window_params = [{transform_indices = @transform_0, window_bounds = array<i64: 24, 16>}, {pipeline_mode = #tpu.pipeline_mode<synchronous>, transform_indices = @transform_1, window_bounds = array<i64: 16, 32>}, {pipeline_mode = #tpu.pipeline_mode<synchronous>, transform_indices = @transform_2, window_bounds = array<i64: 1, 32>}, {pipeline_mode = #tpu.pipeline_mode<synchronous>, transform_indices = @transform_3, window_bounds = array<i64: 32, 32>}, {pipeline_mode = #tpu.pipeline_mode<synchronous>, transform_indices = @transform_4, window_bounds = array<i64: 1, 32>}, {pipeline_mode = #tpu.pipeline_mode<synchronous>, transform_indices = @transform_5, window_bounds = array<i64: 32, 128>}, {pipeline_mode = #tpu.pipeline_mode<synchronous>, transform_indices = @transform_6, window_bounds = array<i64: 1, 128>}, {transform_indices = @transform_7, window_bounds = array<i64: 24, 128>}]} {
    %c0 = arith.constant 0 : index
    %c0_0 = arith.constant 0 : index
    %0 = vector.load %arg1[%c0, %c0_0] : memref<24x16xf32, #tpu.memory_space<vmem>>, vector<24x16xf32>
    %c0_1 = arith.constant 0 : index
    %c0_2 = arith.constant 0 : index
    %1 = vector.load %arg2[%c0_1, %c0_2] : memref<16x32xf32, #tpu.memory_space<vmem>>, vector<16x32xf32>
    %c0_3 = arith.constant 0 : index
    %c0_4 = arith.constant 0 : index
    %2 = vector.load %arg3[%c0_3, %c0_4] : memref<1x32xf32, #tpu.memory_space<vmem>>, vector<1x32xf32>
    %cst = arith.constant dense<0.000000e+00> : vector<24x32xf32>
    %3 = tpu.matmul %0, %1, %cst {dimension_numbers = #tpu.dot_dimension_numbers<[1], [0], [0], [1], [0, 0, 1, 1], [], []>} : vector<24x16xf32>, vector<16x32xf32>, vector<24x32xf32> -> vector<24x32xf32>
    %4 = vector.broadcast %2 : vector<1x32xf32> to vector<24x32xf32>
    %5 = arith.addf %3, %4 : vector<24x32xf32>
    %cst_5 = arith.constant 0.000000e+00 : f32
    %6 = vector.broadcast %cst_5 : f32 to vector<24x32xf32>
    %7 = arith.maximumf %5, %6 : vector<24x32xf32>
    %c0_6 = arith.constant 0 : index
    %c0_7 = arith.constant 0 : index
    %8 = vector.load %arg4[%c0_6, %c0_7] : memref<32x32xf32, #tpu.memory_space<vmem>>, vector<32x32xf32>
    %c0_8 = arith.constant 0 : index
    %c0_9 = arith.constant 0 : index
    %9 = vector.load %arg5[%c0_8, %c0_9] : memref<1x32xf32, #tpu.memory_space<vmem>>, vector<1x32xf32>
    %cst_10 = arith.constant dense<0.000000e+00> : vector<24x32xf32>
    %10 = tpu.matmul %7, %8, %cst_10 {dimension_numbers = #tpu.dot_dimension_numbers<[1], [0], [0], [1], [0, 0, 1, 1], [], []>} : vector<24x32xf32>, vector<32x32xf32>, vector<24x32xf32> -> vector<24x32xf32>
    %11 = vector.broadcast %9 : vector<1x32xf32> to vector<24x32xf32>
    %12 = arith.addf %10, %11 : vector<24x32xf32>
    %cst_11 = arith.constant 0.000000e+00 : f32
    %13 = vector.broadcast %cst_11 : f32 to vector<24x32xf32>
    %14 = arith.maximumf %12, %13 : vector<24x32xf32>
    %c0_12 = arith.constant 0 : index
    %c0_13 = arith.constant 0 : index
    %15 = vector.load %arg6[%c0_12, %c0_13] : memref<32x128xf32, #tpu.memory_space<vmem>>, vector<32x128xf32>
    %c0_14 = arith.constant 0 : index
    %c0_15 = arith.constant 0 : index
    %16 = vector.load %arg7[%c0_14, %c0_15] : memref<1x128xf32, #tpu.memory_space<vmem>>, vector<1x128xf32>
    %cst_16 = arith.constant dense<0.000000e+00> : vector<24x128xf32>
    %17 = tpu.matmul %14, %15, %cst_16 {dimension_numbers = #tpu.dot_dimension_numbers<[1], [0], [0], [1], [0, 0, 1, 1], [], []>} : vector<24x32xf32>, vector<32x128xf32>, vector<24x128xf32> -> vector<24x128xf32>
    %18 = vector.broadcast %16 : vector<1x128xf32> to vector<24x128xf32>
    %19 = arith.addf %17, %18 : vector<24x128xf32>
    %c0_17 = arith.constant 0 : index
    %c0_18 = arith.constant 0 : index
    %20 = vector.load %arg8[%c0_17, %c0_18] : memref<24x128xf32, #tpu.memory_space<vmem>>, vector<24x128xf32>
    tpu.vector_store %arg8[%c0_17, %c0_18], %19 {strides = array<i32>} : memref<24x128xf32, #tpu.memory_space<vmem>>, vector<24x128xf32>,
    return
  }
  func.func @transform_0(%arg0: i32) -> (i32, i32) {
    %c0_i32 = arith.constant 0 : i32
    %c0_i32_0 = arith.constant 0 : i32
    return %arg0, %c0_i32 : i32, i32
  }
  func.func @transform_1(%arg0: i32) -> (i32, i32) {
    %c0_i32 = arith.constant 0 : i32
    %c0_i32_0 = arith.constant 0 : i32
    %c0_i32_1 = arith.constant 0 : i32
    return %c0_i32, %c0_i32_0 : i32, i32
  }
  func.func @transform_2(%arg0: i32) -> (i32, i32) {
    %c0_i32 = arith.constant 0 : i32
    %c0_i32_0 = arith.constant 0 : i32
    %c0_i32_1 = arith.constant 0 : i32
    return %c0_i32, %c0_i32_0 : i32, i32
  }
  func.func @transform_3(%arg0: i32) -> (i32, i32) {
    %c0_i32 = arith.constant 0 : i32
    %c0_i32_0 = arith.constant 0 : i32
    %c0_i32_1 = arith.constant 0 : i32
    return %c0_i32, %c0_i32_0 : i32, i32
  }
  func.func @transform_4(%arg0: i32) -> (i32, i32) {
    %c0_i32 = arith.constant 0 : i32
    %c0_i32_0 = arith.constant 0 : i32
    %c0_i32_1 = arith.constant 0 : i32
    return %c0_i32, %c0_i32_0 : i32, i32
  }
  func.func @transform_5(%arg0: i32) -> (i32, i32) {
    %c0_i32 = arith.constant 0 : i32
    %c0_i32_0 = arith.constant 0 : i32
    %c0_i32_1 = arith.constant 0 : i32
    return %c0_i32, %c0_i32_0 : i32, i32
  }
  func.func @transform_6(%arg0: i32) -> (i32, i32) {
    %c0_i32 = arith.constant 0 : i32
    %c0_i32_0 = arith.constant 0 : i32
    %c0_i32_1 = arith.constant 0 : i32
    return %c0_i32, %c0_i32_0 : i32, i32
  }
  func.func @transform_7(%arg0: i32) -> (i32, i32) {
    %c0_i32 = arith.constant 0 : i32
    %c0_i32_0 = arith.constant 0 : i32
    return %arg0, %c0_i32 : i32, i32
  }
}

</mosaic_0001>

<llo_original>
// kernel: tpu_custom_call.1
$region0: #{tpu_custom_call.1}
  #allocation0 [shape = 'u32[]', space=smem, size = 0x4, offset = 0x4, fixed_abs, tag = 'smem constant byte address 0x4 - core index']
  #allocation1 [shape = 'u32[144,128]{1,0:T(1,128)}', space=vmem, size = 0x12000, scoped, tag = 'internal scratch']
  %s0 = inlined_call_operand.vmem [shape: f32[24,16], index: 0, kind: input, shape index: {}]
  %s1 = inlined_call_operand.vmem [shape: f32[16,32], index: 1, kind: input, shape index: {}]
  %s2 = inlined_call_operand.vmem [shape: f32[1,32], index: 2, kind: input, shape index: {}]
  %s3 = inlined_call_operand.vmem [shape: f32[32,32], index: 3, kind: input, shape index: {}]
  %s4 = inlined_call_operand.vmem [shape: f32[1,32], index: 4, kind: input, shape index: {}]
  %s5 = inlined_call_operand.hbm [shape: f32[32,128], index: 5, kind: input, shape index: {}]
  %s6 = inlined_call_operand.vmem [shape: f32[1,128], index: 6, kind: input, shape index: {}]
  %s7 = inlined_call_operand.hbm [shape: f32[24,128], index: 7, kind: output, shape index: {}]
  %s8 = sld [smem:[#allocation0]]
  $region42: #{tpu_custom_call.1} parent=0
    _
  %s10 = ssub.s32 1, %s8
  %s11 = scalar_select 0, %s10, %s8
  $region1: #{tpu_custom_call.1} parent=0
    #allocation2 [shape = 'u8[16384]{0}', space=vmem, size = 0x4000, scoped, tag = 'input window, operand 5, single buffered']
    #allocation3 [shape = 's32[1]{0}', space=sflag, size = 0x4, scoped, tag = 'scoped memory for tpu_custom_call.1']
    #allocation4 [shape = 's32[1]{0}', space=sflag, size = 0x4, scoped, tag = 'scoped memory for tpu_custom_call.1']
    #allocation5 [shape = 'u8[12288]{0}', space=vmem, size = 0x3000, scoped, tag = 'output window, operand 0, single buffered']
    %12 = vsyncpa [#allocation3], 0
    %13 = vsyncpa [#allocation4], 0
    // Predicated region
    $region2: #{tpu_custom_call.1} parent=1 // pred_check
      _
    $region3: #{tpu_custom_call.1} parent=1 // pred_check_branch
      %15 = sbr.rel (0) target = $region5
    $region4: #{tpu_custom_call.1} parent=1 // pred_region
      _
    $region5: #{tpu_custom_call.1} parent=1 // pred_fallthru
      _
    // Predicated region
    $region6: #{tpu_custom_call.1} parent=1 // pred_check
      _
    $region7: #{tpu_custom_call.1} parent=1 // pred_check_branch
      %17 = sbr.rel (0) target = $region9
    $region8: #{tpu_custom_call.1} parent=1 // pred_region
      _
    $region9: #{tpu_custom_call.1} parent=1 // pred_fallthru
      _
    // Predicated region
    $region10: #{tpu_custom_call.1} parent=1 // pred_check
      _
    $region11: #{tpu_custom_call.1} parent=1 // pred_check_branch
      %19 = sbr.rel (0) target = $region13
    $region12: #{tpu_custom_call.1} parent=1 // pred_region
      _
    $region13: #{tpu_custom_call.1} parent=1 // pred_fallthru
      _
    // Predicated region
    $region14: #{tpu_custom_call.1} parent=1 // pred_check
      _
    $region15: #{tpu_custom_call.1} parent=1 // pred_check_branch
      %21 = sbr.rel (0) target = $region17
    $region16: #{tpu_custom_call.1} parent=1 // pred_region
      _
    $region17: #{tpu_custom_call.1} parent=1 // pred_fallthru
      _
    // Predicated region
    $region18: #{tpu_custom_call.1} parent=1 // pred_check
      _
    $region19: #{tpu_custom_call.1} parent=1 // pred_check_branch
      %23 = sbr.rel (0) target = $region21
    $region20: #{tpu_custom_call.1} parent=1 // pred_region
      _
    $region21: #{tpu_custom_call.1} parent=1 // pred_fallthru
      _
    // Predicated region
    $region22: #{tpu_custom_call.1} parent=1 // pred_check
      _
    $region23: #{tpu_custom_call.1} parent=1 // pred_check_branch
      %25 = sbr.rel (0) target = $region25
    $region24: #{tpu_custom_call.1} parent=1 // pred_region
      %s27 = ssub.s32 512, 512
      %28 = vsyncadd [#allocation3], %s27
      %s29 = sshll.u32 [#allocation2], 4
      %s30 = int_to_ptr.vmem [resolvable:$true] %s29
      %35 = dma.hbm_to_vmem [thread:$0]  %s5, 512, %s30, [#allocation3], 128, 128, 8
    $region25: #{tpu_custom_call.1} parent=1 // pred_fallthru
      _
    // Predicated region
    $region26: #{tpu_custom_call.1} parent=1 // pred_check
      _
    $region27: #{tpu_custom_call.1} parent=1 // pred_check_branch
      %37 = sbr.rel (0) target = $region29
    $region28: #{tpu_custom_call.1} parent=1 // pred_region
      _
    $region29: #{tpu_custom_call.1} parent=1 // pred_fallthru
      _
    // Predicated region
    $region30: #{tpu_custom_call.1} parent=1 // pred_check
      _
    $region31: #{tpu_custom_call.1} parent=1 // pred_check_branch
      %39 = sbr.rel (0) target = $region33
    $region32: #{tpu_custom_call.1} parent=1 // pred_region
      %40 = dma.done [#allocation3], 512
    $region33: #{tpu_custom_call.1} parent=1 // pred_fallthru
      _
    %v41 = vld [vmem:[%s0] sm:$0xff]
    %v42 = vld [vmem:[%s0 + $0x8] sm:$0xff]
    %v43 = vld [vmem:[%s0 + $0x10] sm:$0xff]
    %v44 = vld [vmem:[%s1] sm:$0xff]
    %v45 = vld [vmem:[%s1 + $0x8] sm:$0xff]
    %v46 = vld [vmem:[%s2] sm:$0x1]
    %v48 = vlaneseq
    %v49 = vshrl.u32 %v48, 7
    %v50 = vsub.s32 0, %v49
    %v51 = vrot.slane %v46, %v50
    %vm53 = vcmask 130048
    %v55 = vsel %vm53, %v41, 0
    %v58 = vsel %vm53, %v42, 0
    %v61 = vsel %vm53, %v43, 0
    %63 = vmatprep.subr.mxu0 0.0
    %64 = vmatpush1.msra.mxu0 %v44
    %65 = vmatprep.subr.mxu0 0.0
    %66 = vmatpush1.msra.mxu0 %v45
    %67 = vmatprep.subr.mxu0 0.0
    %68 = vmatpush1.msra.mxu0 0.0
    %69 = vmatprep.subr.mxu0 0.0
    %70 = vmatpush1.msra.mxu0 0.0
    %71 = vmatprep.subr.mxu0 0.0
    %72 = vmatpush1.msra.mxu0 0.0
    %73 = vmatprep.subr.mxu0 0.0
    %74 = vmatpush1.msra.mxu0 0.0
    %75 = vmatprep.subr.mxu0 0.0
    %76 = vmatpush1.msra.mxu0 0.0
    %77 = vmatprep.subr.mxu0 0.0
    %78 = vmatpush1.msra.mxu0 0.0
    %79 = vmatprep.subr.mxu0 0.0
    %80 = vmatpush1.msra.mxu0 0.0
    %81 = vmatprep.subr.mxu0 0.0
    %82 = vmatpush1.msra.mxu0 0.0
    %83 = vmatprep.subr.mxu0 0.0
    %84 = vmatpush1.msra.mxu0 0.0
    %85 = vmatprep.subr.mxu0 0.0
    %86 = vmatpush1.msra.mxu0 0.0
    %87 = vmatprep.subr.mxu0 0.0
    %88 = vmatpush1.msra.mxu0 0.0
    %89 = vmatprep.subr.mxu0 0.0
    %90 = vmatpush1.msra.mxu0 0.0
    %91 = vmatprep.subr.mxu0 0.0
    %92 = vmatpush1.msra.mxu0 0.0
    %93 = vmatprep.subr.mxu0 0.0
    %94 = vmatpush1.msra.mxu0 0.0
    %95 = vmatprep.subr.mxu0 0.0
    %96 = vmatpush1.msra.mxu0 0.0
    %97 = vmatprep.subr.mxu0 0.0
    %98 = vmatpush1.msra.mxu0 0.0
    %99 = vmatprep.subr.mxu0 0.0
    %100 = vmatpush1.msra.mxu0 0.0
    %101 = vmatprep.subr.mxu0 0.0
    %102 = vmatpush1.msra.mxu0 0.0
    %103 = vmatprep.subr.mxu0 0.0
    %104 = vmatpush1.msra.mxu0 0.0
    %105 = vmatprep.subr.mxu0 0.0
    %106 = vmatpush1.msra.mxu0 0.0
    %107 = vmatprep.subr.mxu0 0.0
    %108 = vmatpush1.msra.mxu0 0.0
    %109 = vmatprep.subr.mxu0 0.0
    %110 = vmatpush1.msra.mxu0 0.0
    %111 = vmatprep.subr.mxu0 0.0
    %112 = vmatpush1.msra.mxu0 0.0
    %113 = vmatprep.subr.mxu0 0.0
    %114 = vmatpush1.msra.mxu0 0.0
    %115 = vmatprep.subr.mxu0 0.0
    %116 = vmatpush1.msra.mxu0 0.0
    %117 = vmatprep.subr.mxu0 0.0
    %118 = vmatpush1.msra.mxu0 0.0
    %119 = vmatprep.subr.mxu0 0.0
    %120 = vmatpush1.msra.mxu0 0.0
    %121 = vmatprep.subr.mxu0 0.0
    %122 = vmatpush1.msra.mxu0 0.0
    %123 = vmatprep.subr.mxu0 0.0
    %124 = vmatpush1.msra.mxu0 0.0
    %125 = vmatprep.subr.mxu0 0.0
    %126 = vmatpush1.msra.mxu0 0.0
    %127 = vmatprep.mubr.f32.mxu0 0.0
    %128 = vmatmul.mubr.f32.gmra.mrb[0].mxu0 %v55
    %v129 = vpop.f32.mrb[0].mxu0
    %v130 = vadd.f32 %v51, %v129
    %v131 = vpop.f32.mrb[0].mxu0
    %132 = vmatprep.mubr.f32.mxu0 0.0
    %133 = vmatmul.mubr.f32.gmra.mrb[0].mxu0 %v58
    %v134 = vpop.f32.mrb[0].mxu0
    %v135 = vadd.f32 %v51, %v134
    %v136 = vpop.f32.mrb[0].mxu0
    %137 = vmatprep.mubr.f32.mxu0 0.0
    %138 = vmatmul.mubr.f32.gmra.mrb[0].mxu0 %v61
    %v139 = vpop.f32.mrb[0].mxu0
    %v140 = vadd.f32 %v51, %v139
    %v141 = vpop.f32.mrb[0].mxu0
    %142 = vdwg.mxu0
    %v143 = vmax.f32 %v130, 0.0
    %v144 = vmax.f32 %v135, 0.0
    %v145 = vmax.f32 %v140, 0.0
    %v146 = vld [vmem:[%s3] sm:$0xff]
    %v147 = vld [vmem:[%s3 + $0x8] sm:$0xff]
    %v148 = vld [vmem:[%s3 + $0x10] sm:$0xff]
    %v149 = vld [vmem:[%s3 + $0x18] sm:$0xff]
    %v150 = vld [vmem:[%s4] sm:$0x1]
    %v152 = vlaneseq
    %v153 = vshrl.u32 %v152, 7
    %v154 = vsub.s32 0, %v153
    %v155 = vrot.slane %v150, %v154
    %vm157 = vcmask 261120
    %v159 = vsel %vm157, %v143, 0
    %v162 = vsel %vm157, %v144, 0
    %v165 = vsel %vm157, %v145, 0
    %167 = vmatprep.subr.mxu0 0.0
    %168 = vmatpush1.msra.mxu0 %v146
    %169 = vmatprep.subr.mxu0 0.0
    %170 = vmatpush1.msra.mxu0 %v147
    %171 = vmatprep.subr.mxu0 0.0
    %172 = vmatpush1.msra.mxu0 %v148
    %173 = vmatprep.subr.mxu0 0.0
    %174 = vmatpush1.msra.mxu0 %v149
    %175 = vmatprep.subr.mxu0 0.0
    %176 = vmatpush1.msra.mxu0 0.0
    %177 = vmatprep.subr.mxu0 0.0
    %178 = vmatpush1.msra.mxu0 0.0
    %179 = vmatprep.subr.mxu0 0.0
    %180 = vmatpush1.msra.mxu0 0.0
    %181 = vmatprep.subr.mxu0 0.0
    %182 = vmatpush1.msra.mxu0 0.0
    %183 = vmatprep.subr.mxu0 0.0
    %184 = vmatpush1.msra.mxu0 0.0
    %185 = vmatprep.subr.mxu0 0.0
    %186 = vmatpush1.msra.mxu0 0.0
    %187 = vmatprep.subr.mxu0 0.0
    %188 = vmatpush1.msra.mxu0 0.0
    %189 = vmatprep.subr.mxu0 0.0
    %190 = vmatpush1.msra.mxu0 0.0
    %191 = vmatprep.subr.mxu0 0.0
    %192 = vmatpush1.msra.mxu0 0.0
    %193 = vmatprep.subr.mxu0 0.0
    %194 = vmatpush1.msra.mxu0 0.0
    %195 = vmatprep.subr.mxu0 0.0
    %196 = vmatpush1.msra.mxu0 0.0
    %197 = vmatprep.subr.mxu0 0.0
    %198 = vmatpush1.msra.mxu0 0.0
    %199 = vmatprep.subr.mxu0 0.0
    %200 = vmatpush1.msra.mxu0 0.0
    %201 = vmatprep.subr.mxu0 0.0
    %202 = vmatpush1.msra.mxu0 0.0
    %203 = vmatprep.subr.mxu0 0.0
    %204 = vmatpush1.msra.mxu0 0.0
    %205 = vmatprep.subr.mxu0 0.0
    %206 = vmatpush1.msra.mxu0 0.0
    %207 = vmatprep.subr.mxu0 0.0
    %208 = vmatpush1.msra.mxu0 0.0
    %209 = vmatprep.subr.mxu0 0.0
    %210 = vmatpush1.msra.mxu0 0.0
    %211 = vmatprep.subr.mxu0 0.0
    %212 = vmatpush1.msra.mxu0 0.0
    %213 = vmatprep.subr.mxu0 0.0
    %214 = vmatpush1.msra.mxu0 0.0
    %215 = vmatprep.subr.mxu0 0.0
    %216 = vmatpush1.msra.mxu0 0.0
    %217 = vmatprep.subr.mxu0 0.0
    %218 = vmatpush1.msra.mxu0 0.0
    %219 = vmatprep.subr.mxu0 0.0
    %220 = vmatpush1.msra.mxu0 0.0
    %221 = vmatprep.subr.mxu0 0.0
    %222 = vmatpush1.msra.mxu0 0.0
    %223 = vmatprep.subr.mxu0 0.0
    %224 = vmatpush1.msra.mxu0 0.0
    %225 = vmatprep.subr.mxu0 0.0
    %226 = vmatpush1.msra.mxu0 0.0
    %227 = vmatprep.subr.mxu0 0.0
    %228 = vmatpush1.msra.mxu0 0.0
    %229 = vmatprep.subr.mxu0 0.0
    %230 = vmatpush1.msra.mxu0 0.0
    %231 = vmatprep.mubr.f32.mxu0 0.0
    %232 = vmatmul.mubr.f32.gmra.mrb[0].mxu0 %v159
    %v233 = vpop.f32.mrb[0].mxu0
    %v234 = vadd.f32 %v155, %v233
    %v235 = vpop.f32.mrb[0].mxu0
    %236 = vmatprep.mubr.f32.mxu0 0.0
    %237 = vmatmul.mubr.f32.gmra.mrb[0].mxu0 %v162
    %v238 = vpop.f32.mrb[0].mxu0
    %v239 = vadd.f32 %v155, %v238
    %v240 = vpop.f32.mrb[0].mxu0
    %241 = vmatprep.mubr.f32.mxu0 0.0
    %242 = vmatmul.mubr.f32.gmra.mrb[0].mxu0 %v165
    %v243 = vpop.f32.mrb[0].mxu0
    %v244 = vadd.f32 %v155, %v243
    %v245 = vpop.f32.mrb[0].mxu0
    %246 = vdwg.mxu0
    %v247 = vmax.f32 %v234, 0.0
    %v248 = vmax.f32 %v239, 0.0
    %v249 = vmax.f32 %v244, 0.0
    %v250 = vld [vmem:[#allocation2] sm:$0xff]
    %v251 = vld [vmem:[#allocation2 + $0x8] sm:$0xff]
    %v252 = vld [vmem:[#allocation2 + $0x10] sm:$0xff]
    %v253 = vld [vmem:[#allocation2 + $0x18] sm:$0xff]
    %v254 = vld [vmem:[%s6] sm:$0x1]
    %v256 = vlaneseq
    %v257 = vshrl.u32 %v256, 7
    %v258 = vsub.s32 0, %v257
    %v259 = vrot.slane %v254, %v258
    %v262 = vsel %vm157, %v247, 0
    %v265 = vsel %vm157, %v248, 0
    %v268 = vsel %vm157, %v249, 0
    %270 = vmatprep.subr.mxu0 0.0
    %271 = vmatpush1.msra.mxu0 %v250
    %272 = vmatprep.subr.mxu0 0.0
    %273 = vmatpush1.msra.mxu0 %v251
    %274 = vmatprep.subr.mxu0 0.0
    %275 = vmatpush1.msra.mxu0 %v252
    %276 = vmatprep.subr.mxu0 0.0
    %277 = vmatpush1.msra.mxu0 %v253
    %278 = vmatprep.subr.mxu0 0.0
    %279 = vmatpush1.msra.mxu0 0.0
    %280 = vmatprep.subr.mxu0 0.0
    %281 = vmatpush1.msra.mxu0 0.0
    %282 = vmatprep.subr.mxu0 0.0
    %283 = vmatpush1.msra.mxu0 0.0
    %284 = vmatprep.subr.mxu0 0.0
    %285 = vmatpush1.msra.mxu0 0.0
    %286 = vmatprep.subr.mxu0 0.0
    %287 = vmatpush1.msra.mxu0 0.0
    %288 = vmatprep.subr.mxu0 0.0
    %289 = vmatpush1.msra.mxu0 0.0
    %290 = vmatprep.subr.mxu0 0.0
    %291 = vmatpush1.msra.mxu0 0.0
    %292 = vmatprep.subr.mxu0 0.0
    %293 = vmatpush1.msra.mxu0 0.0
    %294 = vmatprep.subr.mxu0 0.0
    %295 = vmatpush1.msra.mxu0 0.0
    %296 = vmatprep.subr.mxu0 0.0
    %297 = vmatpush1.msra.mxu0 0.0
    %298 = vmatprep.subr.mxu0 0.0
    %299 = vmatpush1.msra.mxu0 0.0
    %300 = vmatprep.subr.mxu0 0.0
    %301 = vmatpush1.msra.mxu0 0.0
    %302 = vmatprep.subr.mxu0 0.0
    %303 = vmatpush1.msra.mxu0 0.0
    %304 = vmatprep.subr.mxu0 0.0
    %305 = vmatpush1.msra.mxu0 0.0
    %306 = vmatprep.subr.mxu0 0.0
    %307 = vmatpush1.msra.mxu0 0.0
    %308 = vmatprep.subr.mxu0 0.0
    %309 = vmatpush1.msra.mxu0 0.0
    %310 = vmatprep.subr.mxu0 0.0
    %311 = vmatpush1.msra.mxu0 0.0
    %312 = vmatprep.subr.mxu0 0.0
    %313 = vmatpush1.msra.mxu0 0.0
    %314 = vmatprep.subr.mxu0 0.0
    %315 = vmatpush1.msra.mxu0 0.0
    %316 = vmatprep.subr.mxu0 0.0
    %317 = vmatpush1.msra.mxu0 0.0
    %318 = vmatprep.subr.mxu0 0.0
    %319 = vmatpush1.msra.mxu0 0.0
    %320 = vmatprep.subr.mxu0 0.0
    %321 = vmatpush1.msra.mxu0 0.0
    %322 = vmatprep.subr.mxu0 0.0
    %323 = vmatpush1.msra.mxu0 0.0
    %324 = vmatprep.subr.mxu0 0.0
    %325 = vmatpush1.msra.mxu0 0.0
    %326 = vmatprep.subr.mxu0 0.0
    %327 = vmatpush1.msra.mxu0 0.0
    %328 = vmatprep.subr.mxu0 0.0
    %329 = vmatpush1.msra.mxu0 0.0
    %330 = vmatprep.subr.mxu0 0.0
    %331 = vmatpush1.msra.mxu0 0.0
    %332 = vmatprep.subr.mxu0 0.0
    %333 = vmatpush1.msra.mxu0 0.0
    %334 = vmatprep.mubr.f32.mxu0 0.0
    %335 = vmatmul.mubr.f32.gmra.mrb[0].mxu0 %v262
    %v336 = vpop.f32.mrb[0].mxu0
    %v337 = vadd.f32 %v259, %v336
    %v338 = vpop.f32.mrb[0].mxu0
    %339 = vmatprep.mubr.f32.mxu0 0.0
    %340 = vmatmul.mubr.f32.gmra.mrb[0].mxu0 %v265
    %v341 = vpop.f32.mrb[0].mxu0
    %v342 = vadd.f32 %v259, %v341
    %v343 = vpop.f32.mrb[0].mxu0
    %344 = vmatprep.mubr.f32.mxu0 0.0
    %345 = vmatmul.mubr.f32.gmra.mrb[0].mxu0 %v268
    %v346 = vpop.f32.mrb[0].mxu0
    %v347 = vadd.f32 %v259, %v346
    %v348 = vpop.f32.mrb[0].mxu0
    %349 = vdwg.mxu0
    %350 = vst [vmem:[#allocation5] sm:$0xff] %v337
    %351 = vst [vmem:[#allocation5 + $0x8] sm:$0xff] %v342
    %352 = vst [vmem:[#allocation5 + $0x10] sm:$0xff] %v347
    // Predicated region
    $region34: #{tpu_custom_call.1} parent=1 // pred_check
      _
    $region35: #{tpu_custom_call.1} parent=1 // pred_check_branch
      %354 = sbr.rel (0) target = $region37
    $region36: #{tpu_custom_call.1} parent=1 // pred_region
      %s356 = ssub.s32 384, 384
      %357 = vsyncadd [#allocation4], %s356
      %s358 = sshll.u32 [#allocation5], 4
      %s359 = int_to_ptr.vmem [resolvable:$true] %s358
      %364 = dma.vmem_to_hbm [thread:$0]  %s359, 384, %s7, [#allocation4], 128, 128, 8
    $region37: #{tpu_custom_call.1} parent=1 // pred_fallthru
      _
    // Predicated region
    $region38: #{tpu_custom_call.1} parent=1 // pred_check
      _
    $region39: #{tpu_custom_call.1} parent=1 // pred_check_branch
      %366 = sbr.rel (0) target = $region41
    $region40: #{tpu_custom_call.1} parent=1 // pred_region
      %367 = dma.done [#allocation4], 384
    $region41: #{tpu_custom_call.1} parent=1 // pred_fallthru
      _
    %368 = vsyncpa [#allocation3], 1
    %369 = vsyncpa [#allocation4], 1

</llo_original>
